<compile_context>
chip_gen: v7x
topology: tpu7x:2x2x1
jax: 0.10.0
libtpu: 0.0.40
codegen_flags: <defaults>
</compile_context>

<pallas_src>
import jax
import jax.numpy as jnp
from jax.experimental import pallas as pl
from jax.experimental.pallas import tpu as pltpu

_BUFFERED = getattr(pl, "Buffered", None)  # BlockSpec pipeline_mode support


def _make_kernel(compute_dtype):
    def kernel(x_ref, we_ref, be_ref, wd_ref, bd_ref, z_ref, xhat_ref):
        x = x_ref[...]
        we = we_ref[...]
        wd = wd_ref[...]
        if compute_dtype is not None:
            x = x.astype(compute_dtype)
            we = we.astype(compute_dtype)
            wd = wd.astype(compute_dtype)
        # encode: z = x @ W_enc + b_enc  (f32 accumulation on the MXU)
        z_acc = jnp.dot(x, we, preferred_element_type=jnp.float32)
        z_acc = z_acc + be_ref[...].astype(jnp.float32)
        # Round z to the storage dtype *before* the decoder matmul: matches
        # the PyTorch Linear->Linear chain in low precision and keeps both
        # decoder operands on the fast (e.g. bf16 x bf16) MXU path.
        z = z_acc.astype(z_ref.dtype)
        z_ref[...] = z
        zd = z if compute_dtype is None else z.astype(compute_dtype)
        # decode: x_hat = z @ W_dec + b_dec
        xhat_acc = jnp.dot(zd, wd, preferred_element_type=jnp.float32)
        xhat_acc = xhat_acc + bd_ref[...].astype(jnp.float32)
        xhat_ref[...] = xhat_acc.astype(xhat_ref.dtype)
    return kernel


def _sublane(dtype) -> int:
    # rows per packed sublane group: 8 for 4-byte, 16 for 2-byte, 32 for 1-byte
    return 8 * (4 // jnp.dtype(dtype).itemsize)


def _vmem_capacity_bytes() -> int:
    # Chip-aware VMEM capacity: 128 MiB on v5e/v6e, 64 MiB per TC on v7x.
    # Advisory only -- fall back to the most conservative value if the query
    # is unavailable (e.g. non-TPU tracing).
    try:
        return int(pltpu.get_tpu_info().vmem_capacity_bytes)
    except Exception:
        return 64 << 20


def _choose_tile_b(b_pad, sublane, max_tile, min_steps=4):
    """Largest divisor-of-b_pad tile (sublane multiple, <= max_tile) that still
    gives >= min_steps grid steps (software pipelining + >=2 steps/core on the
    v7x megacore).  If the batch is too small for min_steps, take the smallest
    tile so the pipeline still has something to overlap."""
    units = b_pad // sublane
    max_units = max(1, min(units, max_tile // sublane))
    tiles = [d * sublane for d in range(1, max_units + 1) if units % d == 0]
    ok = [t for t in tiles if b_pad // t >= min_steps]
    return max(ok) if ok else min(tiles)


def _const_spec(shape, single_buffer) -> pl.BlockSpec:
    index_map = lambda *_: (0,) * len(shape)
    if single_buffer and _BUFFERED is not None:
        try:
            # Weights/biases never change across the batch grid: one buffer
            # (double-buffering them would be pure VMEM waste).
            return pl.BlockSpec(shape, index_map, pipeline_mode=_BUFFERED(1))
        except TypeError:  # jax without BlockSpec.pipeline_mode
            pass
    return pl.BlockSpec(shape, index_map)


def _build_call(kernel, b_pad, tile_b, d_in, d_out, dtype,
                vmem_limit_bytes, cost, single_buffer_weights):
    grid = (b_pad // tile_b,)
    in_specs = [
        pl.BlockSpec((tile_b, d_in), lambda i: (i, 0)),       # x tile
        _const_spec((d_in, d_out), single_buffer_weights),    # W_enc (resident)
        _const_spec((1, d_out), single_buffer_weights),       # b_enc
        _const_spec((d_out, d_in), single_buffer_weights),    # W_dec (resident)
        _const_spec((1, d_in), single_buffer_weights),        # b_dec
    ]
    out_specs = [
        pl.BlockSpec((tile_b, d_out), lambda i: (i, 0)),      # z
        pl.BlockSpec((tile_b, d_in), lambda i: (i, 0)),       # x_hat
    ]
    return pl.pallas_call(
        kernel,
        out_shape=(
            jax.ShapeDtypeStruct((b_pad, d_out), dtype),
            jax.ShapeDtypeStruct((b_pad, d_in), dtype),
        ),
        grid_spec=pltpu.PrefetchScalarGridSpec(
            num_scalar_prefetch=0,
            grid=grid,
            in_specs=in_specs,
            out_specs=out_specs,
        ),
        compiler_params=pltpu.CompilerParams(
            dimension_semantics=("parallel",),
            vmem_limit_bytes=vmem_limit_bytes,
        ),
        cost_estimate=cost,
    )


def base_compressor_forward(x, w_enc, b_enc, w_dec, b_dec, *,
                            tile_b=None, compute_dtype=None):
    """Forward pass of BaseCompressor: returns (z, x_reconstructed).

    x:      [B, d_in]
    w_enc:  [d_in, d_out]   b_enc: [1, d_out]
    w_dec:  [d_out, d_in]   b_dec: [1, d_in]
    compute_dtype: optional dtype (e.g. jnp.bfloat16) for the MXU operands;
                   accumulation and bias adds stay f32.
    """
    B, d_in = x.shape
    d_out = w_enc.shape[1]
    dtype = x.dtype
    itemsize = jnp.dtype(dtype).itemsize
    sublane = _sublane(dtype)

    # Lane-dense z/x_hat stores need 128-aligned feature dims; on v6e/v7x a
    # d_out that is a multiple of 256 additionally fills the MXU width.
    assert d_in % 128 == 0 and d_out % 128 == 0, (
        f"d_in={d_in}, d_out={d_out} must be multiples of 128 for lane-dense "
        "stores / full MXU width")

    w_bytes = (w_enc.size * w_enc.dtype.itemsize
               + w_dec.size * w_dec.dtype.itemsize
               + b_enc.size * b_enc.dtype.itemsize
               + b_dec.size * b_dec.dtype.itemsize)

    vmem_cap = _vmem_capacity_bytes()
    vmem_ceiling = int(0.85 * vmem_cap)   # leave compiler-scratch headroom

    # Per-row activation VMEM (double-buffered x / z / x_hat tiles).
    row_bytes = 2 * (2 * d_in + d_out) * itemsize
    avail_rows = max(0, (vmem_ceiling - w_bytes - (2 << 20)) // row_bytes)
    max_tile = max(sublane, min(512, (avail_rows // sublane) * sublane))
    # TODO(synk): if w_bytes alone exceeds vmem_ceiling (possible on v7x's
    # 64 MiB with large f32 weights), stream d_out-chunks of W_enc/W_dec over
    # an extra "arbitrary" grid axis (f32 x_hat accumulator in VMEM scratch)
    # instead of keeping both weights fully resident.

    if tile_b is None:
        # Sublane-aligned batches pay no pad/slice; ragged ones pad only to
        # the next sublane multiple, and tile_b divides that exactly.
        B_pad = -(-B // sublane) * sublane
        tile_b = _choose_tile_b(B_pad, sublane, max_tile)
    else:
        assert tile_b % sublane == 0, (
            f"tile_b={tile_b} must be a multiple of the sublane count ({sublane})")
        B_pad = -(-B // tile_b) * tile_b

    x_in = x if B_pad == B else jnp.pad(x, ((0, B_pad - B), (0, 0)))

    # VMEM budget: resident single-buffered weights + double-buffered tiles.
    act_bytes = 2 * tile_b * (2 * d_in + d_out) * itemsize
    vmem_need = w_bytes + act_bytes
    vmem_limit = int(min(vmem_ceiling,
                         max(2 * vmem_need + (4 << 20), 32 << 20)))

    flops = 4 * B_pad * d_in * d_out + 2 * B_pad * (d_in + d_out)
    bytes_accessed = (2 * B_pad * d_in + B_pad * d_out) * itemsize + w_bytes
    cost = pl.CostEstimate(flops=flops, transcendentals=0,
                           bytes_accessed=bytes_accessed)

    kernel = _make_kernel(compute_dtype)
    args = (x_in, w_enc, b_enc, w_dec, b_dec)
    try:
        z, xhat = _build_call(kernel, B_pad, tile_b, d_in, d_out, dtype,
                              vmem_limit, cost, True)(*args)
    except (pltpu.LoweringException, NotImplementedError,
            ValueError, TypeError):
        # Narrow fallback: only for jax versions whose TPU lowering rejects
        # BlockSpec.pipeline_mode (single-buffered weights).  Genuine runtime
        # failures (VMEM OOM, XLA errors) propagate unmasked.
        z, xhat = _build_call(kernel, B_pad, tile_b, d_in, d_out, dtype,
                              vmem_limit, cost, False)(*args)

    if B_pad != B:
        z, xhat = z[:B], xhat[:B]
    return z, xhat


def init_params(key, d_in, d_out, dtype=jnp.float32):
    """nn.Linear-style init U(-1/sqrt(fan_in), 1/sqrt(fan_in)); weights pre-transposed."""
    k1, k2, k3, k4 = jax.random.split(key, 4)
    lim_e = 1.0 / float(d_in) ** 0.5
    lim_d = 1.0 / float(d_out) ** 0.5
    w_enc = jax.random.uniform(k1, (d_in, d_out), dtype, -lim_e, lim_e)
    b_enc = jax.random.uniform(k2, (1, d_out), dtype, -lim_e, lim_e)
    w_dec = jax.random.uniform(k3, (d_out, d_in), dtype, -lim_d, lim_d)
    b_dec = jax.random.uniform(k4, (1, d_in), dtype, -lim_d, lim_d)
    return w_enc, b_enc, w_dec, b_dec


if __name__ == "__main__":
    key = jax.random.PRNGKey(0)
    # Small, layout-friendly demo shapes: d_out=256 fills the 256-wide MXU on
    # v6e/v7x; B=256 is sublane-aligned (no pad/slice) and auto-tiles to
    # tile_b=64 -> 4 "parallel" grid steps (pipelining + 2 steps/core on v7x).
    B, d_in, d_out = 256, 512, 256

    k_x, k_p = jax.random.split(key)
    x = jax.random.normal(k_x, (B, d_in), jnp.float32)
    w_enc, b_enc, w_dec, b_dec = init_params(k_p, d_in, d_out)

    z, x_hat = base_compressor_forward(x, w_enc, b_enc, w_dec, b_dec)
    jax.block_until_ready((z, x_hat))

    # Reference check against plain JAX (same semantics as the torch forward).
    z_ref = x @ w_enc + b_enc
    x_hat_ref = z_ref @ w_dec + b_dec
    assert z.shape == (B, d_out) and x_hat.shape == (B, d_in)
    assert jnp.allclose(z, z_ref, atol=1e-4, rtol=1e-4), \
        float(jnp.abs(z - z_ref).max())
    assert jnp.allclose(x_hat, x_hat_ref, atol=1e-4, rtol=1e-4), \
        float(jnp.abs(x_hat - x_hat_ref).max())

    print("KERNEL_OK")
</pallas_src>

<mosaic_0001>
module attributes {stable_mosaic.version = 11 : i64} {
  func.func @kernel(%arg0: i32, %arg1: memref<64x512xf32, #tpu.memory_space<vmem>>, %arg2: memref<512x256xf32, #tpu.memory_space<vmem>>, %arg3: memref<1x256xf32, #tpu.memory_space<vmem>>, %arg4: memref<256x512xf32, #tpu.memory_space<vmem>>, %arg5: memref<1x512xf32, #tpu.memory_space<vmem>>, %arg6: memref<64x256xf32, #tpu.memory_space<vmem>>, %arg7: memref<64x512xf32, #tpu.memory_space<vmem>>) attributes {dimension_semantics = [#tpu.dimension_semantics<parallel>], iteration_bounds = array<i64: 4>, scalar_prefetch = 0 : i64, scratch_operands = 0 : i64, tpu.core_type = #tpu.core_type<tc>, window_params = [{transform_indices = @transform_0, window_bounds = array<i64: 64, 512>}, {pipeline_mode = #tpu.pipeline_mode<synchronous>, transform_indices = @transform_1, window_bounds = array<i64: 512, 256>}, {pipeline_mode = #tpu.pipeline_mode<synchronous>, transform_indices = @transform_2, window_bounds = array<i64: 1, 256>}, {pipeline_mode = #tpu.pipeline_mode<synchronous>, transform_indices = @transform_3, window_bounds = array<i64: 256, 512>}, {pipeline_mode = #tpu.pipeline_mode<synchronous>, transform_indices = @transform_4, window_bounds = array<i64: 1, 512>}, {transform_indices = @transform_5, window_bounds = array<i64: 64, 256>}, {transform_indices = @transform_6, window_bounds = array<i64: 64, 512>}]} {
    %c0 = arith.constant 0 : index
    %c0_0 = arith.constant 0 : index
    %0 = vector.load %arg1[%c0, %c0_0] : memref<64x512xf32, #tpu.memory_space<vmem>>, vector<64x512xf32>
    %c0_1 = arith.constant 0 : index
    %c0_2 = arith.constant 0 : index
    %1 = vector.load %arg2[%c0_1, %c0_2] : memref<512x256xf32, #tpu.memory_space<vmem>>, vector<512x256xf32>
    %c0_3 = arith.constant 0 : index
    %c0_4 = arith.constant 0 : index
    %2 = vector.load %arg4[%c0_3, %c0_4] : memref<256x512xf32, #tpu.memory_space<vmem>>, vector<256x512xf32>
    %cst = arith.constant dense<0.000000e+00> : vector<64x256xf32>
    %3 = tpu.matmul %0, %1, %cst {dimension_numbers = #tpu.dot_dimension_numbers<[1], [0], [0], [1], [0, 0, 1, 1], [], []>} : vector<64x512xf32>, vector<512x256xf32>, vector<64x256xf32> -> vector<64x256xf32>
    %c0_5 = arith.constant 0 : index
    %c0_6 = arith.constant 0 : index
    %4 = vector.load %arg3[%c0_5, %c0_6] : memref<1x256xf32, #tpu.memory_space<vmem>>, vector<1x256xf32>
    %5 = vector.broadcast %4 : vector<1x256xf32> to vector<64x256xf32>
    %6 = arith.addf %3, %5 : vector<64x256xf32>
    %c0_7 = arith.constant 0 : index
    %c0_8 = arith.constant 0 : index
    %7 = vector.load %arg6[%c0_7, %c0_8] : memref<64x256xf32, #tpu.memory_space<vmem>>, vector<64x256xf32>
    tpu.vector_store %arg6[%c0_7, %c0_8], %6 {strides = array<i32>} : memref<64x256xf32, #tpu.memory_space<vmem>>, vector<64x256xf32>,
    %cst_9 = arith.constant dense<0.000000e+00> : vector<64x512xf32>
    %8 = tpu.matmul %6, %2, %cst_9 {dimension_numbers = #tpu.dot_dimension_numbers<[1], [0], [0], [1], [0, 0, 1, 1], [], []>} : vector<64x256xf32>, vector<256x512xf32>, vector<64x512xf32> -> vector<64x512xf32>
    %c0_10 = arith.constant 0 : index
    %c0_11 = arith.constant 0 : index
    %9 = vector.load %arg5[%c0_10, %c0_11] : memref<1x512xf32, #tpu.memory_space<vmem>>, vector<1x512xf32>
    %10 = vector.broadcast %9 : vector<1x512xf32> to vector<64x512xf32>
    %11 = arith.addf %8, %10 : vector<64x512xf32>
    %c0_12 = arith.constant 0 : index
    %c0_13 = arith.constant 0 : index
    %12 = vector.load %arg7[%c0_12, %c0_13] : memref<64x512xf32, #tpu.memory_space<vmem>>, vector<64x512xf32>
    tpu.vector_store %arg7[%c0_12, %c0_13], %11 {strides = array<i32>} : memref<64x512xf32, #tpu.memory_space<vmem>>, vector<64x512xf32>,
    return
  }
  func.func @transform_0(%arg0: i32) -> (i32, i32) {
    %c0_i32 = arith.constant 0 : i32
    %c0_i32_0 = arith.constant 0 : i32
    return %arg0, %c0_i32 : i32, i32
  }
  func.func @transform_1(%arg0: i32) -> (i32, i32) {
    %c0_i32 = arith.constant 0 : i32
    %c0_i32_0 = arith.constant 0 : i32
    %c0_i32_1 = arith.constant 0 : i32
    return %c0_i32, %c0_i32_0 : i32, i32
  }
  func.func @transform_2(%arg0: i32) -> (i32, i32) {
    %c0_i32 = arith.constant 0 : i32
    %c0_i32_0 = arith.constant 0 : i32
    %c0_i32_1 = arith.constant 0 : i32
    return %c0_i32, %c0_i32_0 : i32, i32
  }
  func.func @transform_3(%arg0: i32) -> (i32, i32) {
    %c0_i32 = arith.constant 0 : i32
    %c0_i32_0 = arith.constant 0 : i32
    %c0_i32_1 = arith.constant 0 : i32
    return %c0_i32, %c0_i32_0 : i32, i32
  }
  func.func @transform_4(%arg0: i32) -> (i32, i32) {
    %c0_i32 = arith.constant 0 : i32
    %c0_i32_0 = arith.constant 0 : i32
    %c0_i32_1 = arith.constant 0 : i32
    return %c0_i32, %c0_i32_0 : i32, i32
  }
  func.func @transform_5(%arg0: i32) -> (i32, i32) {
    %c0_i32 = arith.constant 0 : i32
    %c0_i32_0 = arith.constant 0 : i32
    return %arg0, %c0_i32 : i32, i32
  }
  func.func @transform_6(%arg0: i32) -> (i32, i32) {
    %c0_i32 = arith.constant 0 : i32
    %c0_i32_0 = arith.constant 0 : i32
    return %arg0, %c0_i32 : i32, i32
  }
}

</mosaic_0001>

<llo_original>
// kernel: tpu_custom_call.1
$region0: #{tpu_custom_call.1}
  #allocation0 [shape = 'u32[]', space=smem, size = 0x4, offset = 0x4, fixed_abs, tag = 'smem constant byte address 0x4 - core index']
  #allocation1 [shape = 'u32[144,128]{1,0:T(1,128)}', space=vmem, size = 0x12000, scoped, tag = 'internal scratch']
  %s0 = inlined_call_operand.hbm [shape: f32[256,512], index: 0, kind: input, shape index: {}]
  %s1 = inlined_call_operand.hbm [shape: f32[512,256], index: 1, kind: input, shape index: {}]
  %s2 = inlined_call_operand.vmem [shape: f32[1,256], index: 2, kind: input, shape index: {}]
  %s3 = inlined_call_operand.hbm [shape: f32[256,512], index: 3, kind: input, shape index: {}]
  %s4 = inlined_call_operand.vmem [shape: f32[1,512], index: 4, kind: input, shape index: {}]
  %s5 = inlined_call_operand.hbm [shape: f32[256,256], index: 5, kind: output, shape index: {0}]
  %s6 = inlined_call_operand.hbm [shape: f32[256,512], index: 6, kind: output, shape index: {1}]
  %7 = xla_tuple %s5, %s6
  %s8 = sld [smem:[#allocation0]]
  $region73: #{tpu_custom_call.1} parent=0
    _
  %s10 = ssub.s32 1, %s8
  %s11 = scalar_select 0, %s10, %s8
  $region1: #{tpu_custom_call.1} parent=0
    #allocation2 [shape = 'u8[262144]{0}', space=vmem, size = 0x40000, scoped, tag = 'input window, operand 0']
    #allocation3 [shape = 's32[2]{0}', space=sflag, size = 0x8, scoped, tag = 'scoped memory for tpu_custom_call.1']
    #allocation4 [shape = 's32[2]{0}', space=sflag, size = 0x8, scoped, tag = 'scoped memory for tpu_custom_call.1']
    #allocation5 [shape = 'u8[524288]{0}', space=vmem, size = 0x80000, scoped, tag = 'input window, operand 1, single buffered']
    #allocation6 [shape = 's32[1]{0}', space=sflag, size = 0x4, scoped, tag = 'scoped memory for tpu_custom_call.1']
    #allocation7 [shape = 'u8[524288]{0}', space=vmem, size = 0x80000, scoped, tag = 'input window, operand 3, single buffered']
    #allocation8 [shape = 'u8[131072]{0}', space=vmem, size = 0x20000, scoped, tag = 'output window, operand 0']
    #allocation9 [shape = 'u8[262144]{0}', space=vmem, size = 0x40000, scoped, tag = 'output window, operand 1']
    #allocation10 [shape = 's32[2]{0}', space=sflag, size = 0x8, scoped, tag = 'scoped memory for tpu_custom_call.1']
    %12 = vsyncpa [#allocation3], 0
    %s13 = scalar_lea.sflag [#allocation3], 1
    %14 = vsyncpa %s13, 0
    %15 = vsyncpa [#allocation6], 0
    %16 = vsyncpa [#allocation4], 0
    %s17 = scalar_lea.sflag [#allocation4], 1
    %18 = vsyncpa %s17, 0
    %19 = vsyncpa [#allocation10], 0
    %s20 = scalar_lea.sflag [#allocation10], 1
    %21 = vsyncpa %s20, 0
    loop: start=0, step=1, limit=6
    $region2: #{tpu_custom_call.1} parent=1 // loop_pre_header
      _
    $region3: #{tpu_custom_call.1} parent=1 // loop_header
      %s23 = sphi 0, %s27
      %p24 = scmp.ge.s32.totalorder %s23, 6
      %s33 = sphi 0, %s35
      %s36 = sphi 0, %s33
      %s37 = sphi 0, %s36
      %s53 = sphi 0, %s37
      %s57 = sphi 0, %s57
      %s59 = sphi 0, %s57
      %s60 = sphi 0, %s59
      %s74 = sphi 0, %s60
      %s78 = sphi 0, %s78
      %s80 = sphi 0, %s78
      %s81 = sphi 0, %s80
      %s95 = sphi 0, %s81
      %s99 = sphi 0, %s99
      %s101 = sphi 0, %s99
      %s102 = sphi 0, %s101
      %s116 = sphi 0, %s102
      %s120 = sphi 0, %s120
      %s122 = sphi 0, %s120
      %s123 = sphi 0, %s122
      %s137 = sphi 0, %s123
      %s143 = sphi 0, %s145
      %s146 = sphi 0, %s143
      %s147 = sphi 0, %s146
      %s163 = sphi 0, %s147
      %s169 = sphi 0, %s171
      %s172 = sphi 0, %s169
      %s173 = sphi 0, %s172
      %s189 = sphi 0, %s173
    $region4: #{tpu_custom_call.1} parent=1 // loop_header_branch
      %26 = sbr.rel (%p24) target = $region8
    $region5: #{tpu_custom_call.1} parent=1 // loop_body
      %s28 = ssub.s32 %s23, 1
      %s29 = ssub.s32 %s23, 2
      %s30 = sadd.s32 %s23, 1
      %s31 = ssub.s32 %s23, %s30
      %p32 = scmp.eq.s32.totalorder %s31, 0
      %s34 = sadd.s32 %s33, 1
      %s35 = scalar_select %p32, %s33, %s34
      %p38 = pneg %p32
      %p39 = scmp.eq.s32.totalorder %s23, 3
      %p40 = por %p38, %p39
      %p41 = scmp.ne.s32.totalorder %s33, %s36
      %p42 = scmp.eq.s32.totalorder %s23, 0
      %p43 = por %p41, %p42
      %p44 = scmp.ne.s32.totalorder %s33, %s36
      %p45 = scmp.eq.s32.totalorder %s28, 3
      %p46 = por %p44, %p45
      %p47 = scmp.ne.s32.totalorder %s36, %s37
      %p48 = scmp.eq.s32.totalorder %s28, 0
      %p49 = por %p47, %p48
      %p50 = scmp.ne.s32.totalorder %s36, %s37
      %p51 = scmp.eq.s32.totalorder %s29, 3
      %p52 = por %p50, %p51
      %p54 = scmp.ne.s32.totalorder %s37, %s53
      %p55 = scmp.eq.s32.totalorder %s29, 0
      %p56 = por %p54, %p55
      %s58 = sadd.s32 %s57, 1
      %p61 = scmp.eq.s32.totalorder %s23, 3
      %p62 = scmp.ne.s32.totalorder %s57, %s59
      %p63 = scmp.eq.s32.totalorder %s23, 0
      %p64 = por %p62, %p63
      %p65 = scmp.ne.s32.totalorder %s57, %s59
      %p66 = scmp.eq.s32.totalorder %s28, 3
      %p67 = por %p65, %p66
      %p68 = scmp.ne.s32.totalorder %s59, %s60
      %p69 = scmp.eq.s32.totalorder %s28, 0
      %p70 = por %p68, %p69
      %p71 = scmp.ne.s32.totalorder %s59, %s60
      %p72 = scmp.eq.s32.totalorder %s29, 3
      %p73 = por %p71, %p72
      %p75 = scmp.ne.s32.totalorder %s60, %s74
      %p76 = scmp.eq.s32.totalorder %s29, 0
      %p77 = por %p75, %p76
      %s79 = sadd.s32 %s78, 1
      %p82 = scmp.eq.s32.totalorder %s23, 3
      %p83 = scmp.ne.s32.totalorder %s78, %s80
      %p84 = scmp.eq.s32.totalorder %s23, 0
      %p85 = por %p83, %p84
      %p86 = scmp.ne.s32.totalorder %s78, %s80
      %p87 = scmp.eq.s32.totalorder %s28, 3
      %p88 = por %p86, %p87
      %p89 = scmp.ne.s32.totalorder %s80, %s81
      %p90 = scmp.eq.s32.totalorder %s28, 0
      %p91 = por %p89, %p90
      %p92 = scmp.ne.s32.totalorder %s80, %s81
      %p93 = scmp.eq.s32.totalorder %s29, 3
      %p94 = por %p92, %p93
      %p96 = scmp.ne.s32.totalorder %s81, %s95
      %p97 = scmp.eq.s32.totalorder %s29, 0
      %p98 = por %p96, %p97
      %s100 = sadd.s32 %s99, 1
      %p103 = scmp.eq.s32.totalorder %s23, 3
      %p104 = scmp.ne.s32.totalorder %s99, %s101
      %p105 = scmp.eq.s32.totalorder %s23, 0
      %p106 = por %p104, %p105
      %p107 = scmp.ne.s32.totalorder %s99, %s101
      %p108 = scmp.eq.s32.totalorder %s28, 3
      %p109 = por %p107, %p108
      %p110 = scmp.ne.s32.totalorder %s101, %s102
      %p111 = scmp.eq.s32.totalorder %s28, 0
      %p112 = por %p110, %p111
      %p113 = scmp.ne.s32.totalorder %s101, %s102
      %p114 = scmp.eq.s32.totalorder %s29, 3
      %p115 = por %p113, %p114
      %p117 = scmp.ne.s32.totalorder %s102, %s116
      %p118 = scmp.eq.s32.totalorder %s29, 0
      %p119 = por %p117, %p118
      %s121 = sadd.s32 %s120, 1
      %p124 = scmp.eq.s32.totalorder %s23, 3
      %p125 = scmp.ne.s32.totalorder %s120, %s122
      %p126 = scmp.eq.s32.totalorder %s23, 0
      %p127 = por %p125, %p126
      %p128 = scmp.ne.s32.totalorder %s120, %s122
      %p129 = scmp.eq.s32.totalorder %s28, 3
      %p130 = por %p128, %p129
      %p131 = scmp.ne.s32.totalorder %s122, %s123
      %p132 = scmp.eq.s32.totalorder %s28, 0
      %p133 = por %p131, %p132
      %p134 = scmp.ne.s32.totalorder %s122, %s123
      %p135 = scmp.eq.s32.totalorder %s29, 3
      %p136 = por %p134, %p135
      %p138 = scmp.ne.s32.totalorder %s123, %s137
      %p139 = scmp.eq.s32.totalorder %s29, 0
      %p140 = por %p138, %p139
      %s141 = ssub.s32 %s23, %s30
      %p142 = scmp.eq.s32.totalorder %s141, 0
      %s144 = sadd.s32 %s143, 1
      %s145 = scalar_select %p142, %s143, %s144
      %p148 = pneg %p142
      %p149 = scmp.eq.s32.totalorder %s23, 3
      %p150 = por %p148, %p149
      %p151 = scmp.ne.s32.totalorder %s143, %s146
      %p152 = scmp.eq.s32.totalorder %s23, 0
      %p153 = por %p151, %p152
      %p154 = scmp.ne.s32.totalorder %s143, %s146
      %p155 = scmp.eq.s32.totalorder %s28, 3
      %p156 = por %p154, %p155
      %p157 = scmp.ne.s32.totalorder %s146, %s147
      %p158 = scmp.eq.s32.totalorder %s28, 0
      %p159 = por %p157, %p158
      %p160 = scmp.ne.s32.totalorder %s146, %s147
      %p161 = scmp.eq.s32.totalorder %s29, 3
      %p162 = por %p160, %p161
      %p164 = scmp.ne.s32.totalorder %s147, %s163
      %p165 = scmp.eq.s32.totalorder %s29, 0
      %p166 = por %p164, %p165
      %s167 = ssub.s32 %s23, %s30
      %p168 = scmp.eq.s32.totalorder %s167, 0
      %s170 = sadd.s32 %s169, 1
      %s171 = scalar_select %p168, %s169, %s170
      %p174 = pneg %p168
      %p175 = scmp.eq.s32.totalorder %s23, 3
      %p176 = por %p174, %p175
      %p177 = scmp.ne.s32.totalorder %s169, %s172
      %p178 = scmp.eq.s32.totalorder %s23, 0
      %p179 = por %p177, %p178
      %p180 = scmp.ne.s32.totalorder %s169, %s172
      %p181 = scmp.eq.s32.totalorder %s28, 3
      %p182 = por %p180, %p181
      %p183 = scmp.ne.s32.totalorder %s172, %s173
      %p184 = scmp.eq.s32.totalorder %s28, 0
      %p185 = por %p183, %p184
      %p186 = scmp.ne.s32.totalorder %s172, %s173
      %p187 = scmp.eq.s32.totalorder %s29, 3
      %p188 = por %p186, %p187
      %p190 = scmp.ne.s32.totalorder %s173, %s189
      %p191 = scmp.eq.s32.totalorder %s29, 0
      %p192 = por %p190, %p191
      %p193 = scmp.le.s32.totalorder 1, %s23
      %p194 = scmp.lt.s32.totalorder %s23, 5
      %p195 = pnand %p193, %p194
      %p196 = pneg %p195
      // Predicated region
      $region9: #{tpu_custom_call.1} parent=5 // pred_check
        _
      $region10: #{tpu_custom_call.1} parent=5 // pred_check_branch
        %198 = sbr.rel (%p195) target = $region12
      $region11: #{tpu_custom_call.1} parent=5 // pred_region
        %s199 = ssub.s32 %s23, 1
        // Predicated region
        $region13: #{tpu_custom_call.1} parent=11 // pred_check
          %p200 = pneg %p70
        $region14: #{tpu_custom_call.1} parent=11 // pred_check_branch
          %202 = sbr.rel (%p200) target = $region16
        $region15: #{tpu_custom_call.1} parent=11 // pred_region
          %s204 = ssub.s32 16384, 16384
          %205 = vsyncadd [#allocation6], %s204
          %s206 = sshll.u32 [#allocation5], 4
          %s207 = int_to_ptr.vmem [resolvable:$true] %s206
          %212 = dma.hbm_to_vmem [thread:$0]  %s1, 16384, %s207, [#allocation6], 256, 256, 16
        $region16: #{tpu_custom_call.1} parent=11 // pred_fallthru
          _
        // Predicated region
        $region17: #{tpu_custom_call.1} parent=11 // pred_check
          %p213 = pneg %p91
        $region18: #{tpu_custom_call.1} parent=11 // pred_check_branch
          %215 = sbr.rel (%p213) target = $region20
        $region19: #{tpu_custom_call.1} parent=11 // pred_region
          _
        $region20: #{tpu_custom_call.1} parent=11 // pred_fallthru
          _
        // Predicated region
        $region21: #{tpu_custom_call.1} parent=11 // pred_check
          %p216 = pneg %p112
        $region22: #{tpu_custom_call.1} parent=11 // pred_check_branch
          %218 = sbr.rel (%p216) target = $region24
        $region23: #{tpu_custom_call.1} parent=11 // pred_region
          %s220 = ssub.s32 16384, 16384
          %221 = vsyncadd [#allocation6], %s220
          %s222 = sshll.u32 [#allocation7], 4
          %s223 = int_to_ptr.vmem [resolvable:$true] %s222
          %228 = dma.hbm_to_vmem [thread:$0]  %s3, 16384, %s223, [#allocation6], 512, 512, 32
        $region24: #{tpu_custom_call.1} parent=11 // pred_fallthru
          _
        // Predicated region
        $region25: #{tpu_custom_call.1} parent=11 // pred_check
          %p229 = pneg %p133
        $region26: #{tpu_custom_call.1} parent=11 // pred_check_branch
          %231 = sbr.rel (%p229) target = $region28
        $region27: #{tpu_custom_call.1} parent=11 // pred_region
          _
        $region28: #{tpu_custom_call.1} parent=11 // pred_fallthru
          _
      $region12: #{tpu_custom_call.1} parent=5 // pred_fallthru
        _
      %p232 = scmp.lt.s32.totalorder %s23, 4
      // Predicated region
      $region29: #{tpu_custom_call.1} parent=5 // pred_check
        %p233 = pneg %p232
      $region30: #{tpu_custom_call.1} parent=5 // pred_check_branch
        %235 = sbr.rel (%p233) target = $region32
      $region31: #{tpu_custom_call.1} parent=5 // pred_region
        // Predicated region
        $region33: #{tpu_custom_call.1} parent=31 // pred_check
          %p236 = pneg %p43
        $region34: #{tpu_custom_call.1} parent=31 // pred_check_branch
          %238 = sbr.rel (%p236) target = $region36
        $region35: #{tpu_custom_call.1} parent=31 // pred_region
          %s239 = sand.u32 %s33, 1
          %s240 = scalar_lea.sflag [#allocation3], %s239
          %s241 = sand.u32 %s33, 1
          %s242 = smul.addr %s241, 256
          %s243 = scalar_lea.vmem [#allocation2], %s242
          %s244 = smul.u32 8, %s23
          %s246 = ssub.s32 4096, 4096
          %247 = vsyncadd %s240, %s246
          %s248 = smul.addr %s244, 4
          %s249 = smul.addr %s248, 128
          %s250 = scalar_lea.hbm %s0, %s249
          %s251 = sshll.u32 %s243, 4
          %s252 = int_to_ptr.vmem [resolvable:$true] %s251
          %257 = dma.hbm_to_vmem [thread:$0]  %s250, 4096, %s252, %s240, 512, 512, 32
        $region36: #{tpu_custom_call.1} parent=31 // pred_fallthru
          _
      $region32: #{tpu_custom_call.1} parent=5 // pred_fallthru
        _
      %p258 = scmp.le.s32.totalorder 1, %s23
      %p259 = scmp.lt.s32.totalorder %s23, 5
      %p260 = pnand %p258, %p259
      %p261 = pneg %p260
      // Predicated region
      $region37: #{tpu_custom_call.1} parent=5 // pred_check
        _
      $region38: #{tpu_custom_call.1} parent=5 // pred_check_branch
        %263 = sbr.rel (%p260) target = $region40
      $region39: #{tpu_custom_call.1} parent=5 // pred_region
        %s264 = ssub.s32 %s23, 1
        %s265 = sand.u32 %s36, 1
        %s266 = scalar_lea.sflag [#allocation3], %s265
        %s267 = sand.u32 %s36, 1
        %s268 = smul.addr %s267, 256
        %s269 = scalar_lea.vmem [#allocation2], %s268
        // Predicated region
        $region41: #{tpu_custom_call.1} parent=39 // pred_check
          %p270 = pneg %p49
        $region42: #{tpu_custom_call.1} parent=39 // pred_check_branch
          %272 = sbr.rel (%p270) target = $region44
        $region43: #{tpu_custom_call.1} parent=39 // pred_region
          %273 = dma.done %s266, 4096
        $region44: #{tpu_custom_call.1} parent=39 // pred_fallthru
          _
        // Predicated region
        $region45: #{tpu_custom_call.1} parent=39 // pred_check
          %p274 = pneg %p70
        $region46: #{tpu_custom_call.1} parent=39 // pred_check_branch
          %276 = sbr.rel (%p274) target = $region48
        $region47: #{tpu_custom_call.1} parent=39 // pred_region
          %277 = dma.done [#allocation6], 16384
        $region48: #{tpu_custom_call.1} parent=39 // pred_fallthru
          _
        // Predicated region
        $region49: #{tpu_custom_call.1} parent=39 // pred_check
          %p278 = pneg %p112
        $region50: #{tpu_custom_call.1} parent=39 // pred_check_branch
          %280 = sbr.rel (%p278) target = $region52
        $region51: #{tpu_custom_call.1} parent=39 // pred_region
          %281 = dma.done [#allocation6], 16384
        $region52: #{tpu_custom_call.1} parent=39 // pred_fallthru
          _
        %s282 = sand.u32 %s36, 1
        %s283 = scalar_lea.sflag [#allocation3], %s282
        %s284 = sand.u32 %s36, 1
        %s285 = smul.addr %s284, 256
        %s286 = scalar_lea.vmem [#allocation2], %s285
        %p287 = pneg %p49
        %p288 = pneg %p46
        %p289 = pneg %p70
        %p290 = pneg %p67
        %p291 = pneg %p91
        %p292 = pneg %p88
        %p293 = pneg %p112
        %p294 = pneg %p109
        %p295 = pneg %p133
        %p296 = pneg %p130
        %p297 = pneg %p159
        %p298 = pneg %p156
        %s299 = sand.u32 %s146, 1
        %s300 = scalar_lea.sflag [#allocation4], %s299
        %s301 = sand.u32 %s146, 1
        %s302 = smul.addr %s301, 128
        %s303 = scalar_lea.vmem [#allocation8], %s302
        %p304 = pneg %p185
        %p305 = pneg %p182
        %s306 = sand.u32 %s172, 1
        %s307 = scalar_lea.sflag [#allocation10], %s306
        %s308 = sand.u32 %s172, 1
        %s309 = smul.addr %s308, 256
        %s310 = scalar_lea.vmem [#allocation9], %s309
        %s311 = smul.u32 8, %s28
        %s312 = smul.u32 8, %s28
        %s313 = smul.u32 8, %s28
        %v314 = vld [vmem:[%s269] sm:$0xff]
        %v315 = vld [vmem:[%s269 + $0x8] sm:$0xff]
        %v316 = vld [vmem:[%s269 + $0x10] sm:$0xff]
        %v317 = vld [vmem:[%s269 + $0x18] sm:$0xff]
        %v318 = vld [vmem:[%s269 + $0x20] sm:$0xff]
        %v319 = vld [vmem:[%s269 + $0x28] sm:$0xff]
        %v320 = vld [vmem:[%s269 + $0x30] sm:$0xff]
        %v321 = vld [vmem:[%s269 + $0x38] sm:$0xff]
        %v322 = vld [vmem:[%s269 + $0x40] sm:$0xff]
        %v323 = vld [vmem:[%s269 + $0x48] sm:$0xff]
        %v324 = vld [vmem:[%s269 + $0x50] sm:$0xff]
        %v325 = vld [vmem:[%s269 + $0x58] sm:$0xff]
        %v326 = vld [vmem:[%s269 + $0x60] sm:$0xff]
        %v327 = vld [vmem:[%s269 + $0x68] sm:$0xff]
        %v328 = vld [vmem:[%s269 + $0x70] sm:$0xff]
        %v329 = vld [vmem:[%s269 + $0x78] sm:$0xff]
        %v330 = vld [vmem:[%s269 + $0x80] sm:$0xff]
        %v331 = vld [vmem:[%s269 + $0x88] sm:$0xff]
        %v332 = vld [vmem:[%s269 + $0x90] sm:$0xff]
        %v333 = vld [vmem:[%s269 + $0x98] sm:$0xff]
        %v334 = vld [vmem:[%s269 + $0xa0] sm:$0xff]
        %v335 = vld [vmem:[%s269 + $0xa8] sm:$0xff]
        %v336 = vld [vmem:[%s269 + $0xb0] sm:$0xff]
        %v337 = vld [vmem:[%s269 + $0xb8] sm:$0xff]
        %v338 = vld [vmem:[%s269 + $0xc0] sm:$0xff]
        %v339 = vld [vmem:[%s269 + $0xc8] sm:$0xff]
        %v340 = vld [vmem:[%s269 + $0xd0] sm:$0xff]
        %v341 = vld [vmem:[%s269 + $0xd8] sm:$0xff]
        %v342 = vld [vmem:[%s269 + $0xe0] sm:$0xff]
        %v343 = vld [vmem:[%s269 + $0xe8] sm:$0xff]
        %v344 = vld [vmem:[%s269 + $0xf0] sm:$0xff]
        %v345 = vld [vmem:[%s269 + $0xf8] sm:$0xff]
        %v346 = vld [vmem:[#allocation5] sm:$0xff]
        %v347 = vld [vmem:[#allocation5 + $0x8] sm:$0xff]
        %v348 = vld [vmem:[#allocation5 + $0x10] sm:$0xff]
        %v349 = vld [vmem:[#allocation5 + $0x18] sm:$0xff]
        %v350 = vld [vmem:[#allocation5 + $0x20] sm:$0xff]
        %v351 = vld [vmem:[#allocation5 + $0x28] sm:$0xff]
        %v352 = vld [vmem:[#allocation5 + $0x30] sm:$0xff]
        %v353 = vld [vmem:[#allocation5 + $0x38] sm:$0xff]
        %v354 = vld [vmem:[#allocation5 + $0x40] sm:$0xff]
        %v355 = vld [vmem:[#allocation5 + $0x48] sm:$0xff]
        %v356 = vld [vmem:[#allocation5 + $0x50] sm:$0xff]
        %v357 = vld [vmem:[#allocation5 + $0x58] sm:$0xff]
        %v358 = vld [vmem:[#allocation5 + $0x60] sm:$0xff]
        %v359 = vld [vmem:[#allocation5 + $0x68] sm:$0xff]
        %v360 = vld [vmem:[#allocation5 + $0x70] sm:$0xff]
        %v361 = vld [vmem:[#allocation5 + $0x78] sm:$0xff]
        %v362 = vld [vmem:[#allocation5 + $0x80] sm:$0xff]
        %v363 = vld [vmem:[#allocation5 + $0x88] sm:$0xff]
        %v364 = vld [vmem:[#allocation5 + $0x90] sm:$0xff]
        %v365 = vld [vmem:[#allocation5 + $0x98] sm:$0xff]
        %v366 = vld [vmem:[#allocation5 + $0xa0] sm:$0xff]
        %v367 = vld [vmem:[#allocation5 + $0xa8] sm:$0xff]
        %v368 = vld [vmem:[#allocation5 + $0xb0] sm:$0xff]
        %v369 = vld [vmem:[#allocation5 + $0xb8] sm:$0xff]
        %v370 = vld [vmem:[#allocation5 + $0xc0] sm:$0xff]
        %v371 = vld [vmem:[#allocation5 + $0xc8] sm:$0xff]
        %v372 = vld [vmem:[#allocation5 + $0xd0] sm:$0xff]
        %v373 = vld [vmem:[#allocation5 + $0xd8] sm:$0xff]
        %v374 = vld [vmem:[#allocation5 + $0xe0] sm:$0xff]
        %v375 = vld [vmem:[#allocation5 + $0xe8] sm:$0xff]
        %v376 = vld [vmem:[#allocation5 + $0xf0] sm:$0xff]
        %v377 = vld [vmem:[#allocation5 + $0xf8] sm:$0xff]
        %v378 = vld [vmem:[#allocation5 + $0x100] sm:$0xff]
        %v379 = vld [vmem:[#allocation5 + $0x108] sm:$0xff]
        %v380 = vld [vmem:[#allocation5 + $0x110] sm:$0xff]
        %v381 = vld [vmem:[#allocation5 + $0x118] sm:$0xff]
        %v382 = vld [vmem:[#allocation5 + $0x120] sm:$0xff]
        %v383 = vld [vmem:[#allocation5 + $0x128] sm:$0xff]
        %v384 = vld [vmem:[#allocation5 + $0x130] sm:$0xff]
        %v385 = vld [vmem:[#allocation5 + $0x138] sm:$0xff]
        %v386 = vld [vmem:[#allocation5 + $0x140] sm:$0xff]
        %v387 = vld [vmem:[#allocation5 + $0x148] sm:$0xff]
        %v388 = vld [vmem:[#allocation5 + $0x150] sm:$0xff]
        %v389 = vld [vmem:[#allocation5 + $0x158] sm:$0xff]
        %v390 = vld [vmem:[#allocation5 + $0x160] sm:$0xff]
        %v391 = vld [vmem:[#allocation5 + $0x168] sm:$0xff]
        %v392 = vld [vmem:[#allocation5 + $0x170] sm:$0xff]
        %v393 = vld [vmem:[#allocation5 + $0x178] sm:$0xff]
        %v394 = vld [vmem:[#allocation5 + $0x180] sm:$0xff]
        %v395 = vld [vmem:[#allocation5 + $0x188] sm:$0xff]
        %v396 = vld [vmem:[#allocation5 + $0x190] sm:$0xff]
        %v397 = vld [vmem:[#allocation5 + $0x198] sm:$0xff]
        %v398 = vld [vmem:[#allocation5 + $0x1a0] sm:$0xff]
        %v399 = vld [vmem:[#allocation5 + $0x1a8] sm:$0xff]
        %v400 = vld [vmem:[#allocation5 + $0x1b0] sm:$0xff]
        %v401 = vld [vmem:[#allocation5 + $0x1b8] sm:$0xff]
        %v402 = vld [vmem:[#allocation5 + $0x1c0] sm:$0xff]
        %v403 = vld [vmem:[#allocation5 + $0x1c8] sm:$0xff]
        %v404 = vld [vmem:[#allocation5 + $0x1d0] sm:$0xff]
        %v405 = vld [vmem:[#allocation5 + $0x1d8] sm:$0xff]
        %v406 = vld [vmem:[#allocation5 + $0x1e0] sm:$0xff]
        %v407 = vld [vmem:[#allocation5 + $0x1e8] sm:$0xff]
        %v408 = vld [vmem:[#allocation5 + $0x1f0] sm:$0xff]
        %v409 = vld [vmem:[#allocation5 + $0x1f8] sm:$0xff]
        %v410 = vld [vmem:[#allocation5 + $0x200] sm:$0xff]
        %v411 = vld [vmem:[#allocation5 + $0x208] sm:$0xff]
        %v412 = vld [vmem:[#allocation5 + $0x210] sm:$0xff]
        %v413 = vld [vmem:[#allocation5 + $0x218] sm:$0xff]
        %v414 = vld [vmem:[#allocation5 + $0x220] sm:$0xff]
        %v415 = vld [vmem:[#allocation5 + $0x228] sm:$0xff]
        %v416 = vld [vmem:[#allocation5 + $0x230] sm:$0xff]
        %v417 = vld [vmem:[#allocation5 + $0x238] sm:$0xff]
        %v418 = vld [vmem:[#allocation5 + $0x240] sm:$0xff]
        %v419 = vld [vmem:[#allocation5 + $0x248] sm:$0xff]
        %v420 = vld [vmem:[#allocation5 + $0x250] sm:$0xff]
        %v421 = vld [vmem:[#allocation5 + $0x258] sm:$0xff]
        %v422 = vld [vmem:[#allocation5 + $0x260] sm:$0xff]
        %v423 = vld [vmem:[#allocation5 + $0x268] sm:$0xff]
        %v424 = vld [vmem:[#allocation5 + $0x270] sm:$0xff]
        %v425 = vld [vmem:[#allocation5 + $0x278] sm:$0xff]
        %v426 = vld [vmem:[#allocation5 + $0x280] sm:$0xff]
        %v427 = vld [vmem:[#allocation5 + $0x288] sm:$0xff]
        %v428 = vld [vmem:[#allocation5 + $0x290] sm:$0xff]
        %v429 = vld [vmem:[#allocation5 + $0x298] sm:$0xff]
        %v430 = vld [vmem:[#allocation5 + $0x2a0] sm:$0xff]
        %v431 = vld [vmem:[#allocation5 + $0x2a8] sm:$0xff]
        %v432 = vld [vmem:[#allocation5 + $0x2b0] sm:$0xff]
        %v433 = vld [vmem:[#allocation5 + $0x2b8] sm:$0xff]
        %v434 = vld [vmem:[#allocation5 + $0x2c0] sm:$0xff]
        %v435 = vld [vmem:[#allocation5 + $0x2c8] sm:$0xff]
        %v436 = vld [vmem:[#allocation5 + $0x2d0] sm:$0xff]
        %v437 = vld [vmem:[#allocation5 + $0x2d8] sm:$0xff]
        %v438 = vld [vmem:[#allocation5 + $0x2e0] sm:$0xff]
        %v439 = vld [vmem:[#allocation5 + $0x2e8] sm:$0xff]
        %v440 = vld [vmem:[#allocation5 + $0x2f0] sm:$0xff]
        %v441 = vld [vmem:[#allocation5 + $0x2f8] sm:$0xff]
        %v442 = vld [vmem:[#allocation5 + $0x300] sm:$0xff]
        %v443 = vld [vmem:[#allocation5 + $0x308] sm:$0xff]
        %v444 = vld [vmem:[#allocation5 + $0x310] sm:$0xff]
        %v445 = vld [vmem:[#allocation5 + $0x318] sm:$0xff]
        %v446 = vld [vmem:[#allocation5 + $0x320] sm:$0xff]
        %v447 = vld [vmem:[#allocation5 + $0x328] sm:$0xff]
        %v448 = vld [vmem:[#allocation5 + $0x330] sm:$0xff]
        %v449 = vld [vmem:[#allocation5 + $0x338] sm:$0xff]
        %v450 = vld [vmem:[#allocation5 + $0x340] sm:$0xff]
        %v451 = vld [vmem:[#allocation5 + $0x348] sm:$0xff]
        %v452 = vld [vmem:[#allocation5 + $0x350] sm:$0xff]
        %v453 = vld [vmem:[#allocation5 + $0x358] sm:$0xff]
        %v454 = vld [vmem:[#allocation5 + $0x360] sm:$0xff]
        %v455 = vld [vmem:[#allocation5 + $0x368] sm:$0xff]
        %v456 = vld [vmem:[#allocation5 + $0x370] sm:$0xff]
        %v457 = vld [vmem:[#allocation5 + $0x378] sm:$0xff]
        %v458 = vld [vmem:[#allocation5 + $0x380] sm:$0xff]
        %v459 = vld [vmem:[#allocation5 + $0x388] sm:$0xff]
        %v460 = vld [vmem:[#allocation5 + $0x390] sm:$0xff]
        %v461 = vld [vmem:[#allocation5 + $0x398] sm:$0xff]
        %v462 = vld [vmem:[#allocation5 + $0x3a0] sm:$0xff]
        %v463 = vld [vmem:[#allocation5 + $0x3a8] sm:$0xff]
        %v464 = vld [vmem:[#allocation5 + $0x3b0] sm:$0xff]
        %v465 = vld [vmem:[#allocation5 + $0x3b8] sm:$0xff]
        %v466 = vld [vmem:[#allocation5 + $0x3c0] sm:$0xff]
        %v467 = vld [vmem:[#allocation5 + $0x3c8] sm:$0xff]
        %v468 = vld [vmem:[#allocation5 + $0x3d0] sm:$0xff]
        %v469 = vld [vmem:[#allocation5 + $0x3d8] sm:$0xff]
        %v470 = vld [vmem:[#allocation5 + $0x3e0] sm:$0xff]
        %v471 = vld [vmem:[#allocation5 + $0x3e8] sm:$0xff]
        %v472 = vld [vmem:[#allocation5 + $0x3f0] sm:$0xff]
        %v473 = vld [vmem:[#allocation5 + $0x3f8] sm:$0xff]
        %v474 = vld [vmem:[#allocation7] sm:$0xff]
        %v475 = vld [vmem:[#allocation7 + $0x8] sm:$0xff]
        %v476 = vld [vmem:[#allocation7 + $0x10] sm:$0xff]
        %v477 = vld [vmem:[#allocation7 + $0x18] sm:$0xff]
        %v478 = vld [vmem:[#allocation7 + $0x20] sm:$0xff]
        %v479 = vld [vmem:[#allocation7 + $0x28] sm:$0xff]
        %v480 = vld [vmem:[#allocation7 + $0x30] sm:$0xff]
        %v481 = vld [vmem:[#allocation7 + $0x38] sm:$0xff]
        %v482 = vld [vmem:[#allocation7 + $0x40] sm:$0xff]
        %v483 = vld [vmem:[#allocation7 + $0x48] sm:$0xff]
        %v484 = vld [vmem:[#allocation7 + $0x50] sm:$0xff]
        %v485 = vld [vmem:[#allocation7 + $0x58] sm:$0xff]
        %v486 = vld [vmem:[#allocation7 + $0x60] sm:$0xff]
        %v487 = vld [vmem:[#allocation7 + $0x68] sm:$0xff]
        %v488 = vld [vmem:[#allocation7 + $0x70] sm:$0xff]
        %v489 = vld [vmem:[#allocation7 + $0x78] sm:$0xff]
        %v490 = vld [vmem:[#allocation7 + $0x80] sm:$0xff]
        %v491 = vld [vmem:[#allocation7 + $0x88] sm:$0xff]
        %v492 = vld [vmem:[#allocation7 + $0x90] sm:$0xff]
        %v493 = vld [vmem:[#allocation7 + $0x98] sm:$0xff]
        %v494 = vld [vmem:[#allocation7 + $0xa0] sm:$0xff]
        %v495 = vld [vmem:[#allocation7 + $0xa8] sm:$0xff]
        %v496 = vld [vmem:[#allocation7 + $0xb0] sm:$0xff]
        %v497 = vld [vmem:[#allocation7 + $0xb8] sm:$0xff]
        %v498 = vld [vmem:[#allocation7 + $0xc0] sm:$0xff]
        %v499 = vld [vmem:[#allocation7 + $0xc8] sm:$0xff]
        %v500 = vld [vmem:[#allocation7 + $0xd0] sm:$0xff]
        %v501 = vld [vmem:[#allocation7 + $0xd8] sm:$0xff]
        %v502 = vld [vmem:[#allocation7 + $0xe0] sm:$0xff]
        %v503 = vld [vmem:[#allocation7 + $0xe8] sm:$0xff]
        %v504 = vld [vmem:[#allocation7 + $0xf0] sm:$0xff]
        %v505 = vld [vmem:[#allocation7 + $0xf8] sm:$0xff]
        %v506 = vld [vmem:[#allocation7 + $0x100] sm:$0xff]
        %v507 = vld [vmem:[#allocation7 + $0x108] sm:$0xff]
        %v508 = vld [vmem:[#allocation7 + $0x110] sm:$0xff]
        %v509 = vld [vmem:[#allocation7 + $0x118] sm:$0xff]
        %v510 = vld [vmem:[#allocation7 + $0x120] sm:$0xff]
        %v511 = vld [vmem:[#allocation7 + $0x128] sm:$0xff]
        %v512 = vld [vmem:[#allocation7 + $0x130] sm:$0xff]
        %v513 = vld [vmem:[#allocation7 + $0x138] sm:$0xff]
        %v514 = vld [vmem:[#allocation7 + $0x140] sm:$0xff]
        %v515 = vld [vmem:[#allocation7 + $0x148] sm:$0xff]
        %v516 = vld [vmem:[#allocation7 + $0x150] sm:$0xff]
        %v517 = vld [vmem:[#allocation7 + $0x158] sm:$0xff]
        %v518 = vld [vmem:[#allocation7 + $0x160] sm:$0xff]
        %v519 = vld [vmem:[#allocation7 + $0x168] sm:$0xff]
        %v520 = vld [vmem:[#allocation7 + $0x170] sm:$0xff]
        %v521 = vld [vmem:[#allocation7 + $0x178] sm:$0xff]
        %v522 = vld [vmem:[#allocation7 + $0x180] sm:$0xff]
        %v523 = vld [vmem:[#allocation7 + $0x188] sm:$0xff]
        %v524 = vld [vmem:[#allocation7 + $0x190] sm:$0xff]
        %v525 = vld [vmem:[#allocation7 + $0x198] sm:$0xff]
        %v526 = vld [vmem:[#allocation7 + $0x1a0] sm:$0xff]
        %v527 = vld [vmem:[#allocation7 + $0x1a8] sm:$0xff]
        %v528 = vld [vmem:[#allocation7 + $0x1b0] sm:$0xff]
        %v529 = vld [vmem:[#allocation7 + $0x1b8] sm:$0xff]
        %v530 = vld [vmem:[#allocation7 + $0x1c0] sm:$0xff]
        %v531 = vld [vmem:[#allocation7 + $0x1c8] sm:$0xff]
        %v532 = vld [vmem:[#allocation7 + $0x1d0] sm:$0xff]
        %v533 = vld [vmem:[#allocation7 + $0x1d8] sm:$0xff]
        %v534 = vld [vmem:[#allocation7 + $0x1e0] sm:$0xff]
        %v535 = vld [vmem:[#allocation7 + $0x1e8] sm:$0xff]
        %v536 = vld [vmem:[#allocation7 + $0x1f0] sm:$0xff]
        %v537 = vld [vmem:[#allocation7 + $0x1f8] sm:$0xff]
        %v538 = vld [vmem:[#allocation7 + $0x200] sm:$0xff]
        %v539 = vld [vmem:[#allocation7 + $0x208] sm:$0xff]
        %v540 = vld [vmem:[#allocation7 + $0x210] sm:$0xff]
        %v541 = vld [vmem:[#allocation7 + $0x218] sm:$0xff]
        %v542 = vld [vmem:[#allocation7 + $0x220] sm:$0xff]
        %v543 = vld [vmem:[#allocation7 + $0x228] sm:$0xff]
        %v544 = vld [vmem:[#allocation7 + $0x230] sm:$0xff]
        %v545 = vld [vmem:[#allocation7 + $0x238] sm:$0xff]
        %v546 = vld [vmem:[#allocation7 + $0x240] sm:$0xff]
        %v547 = vld [vmem:[#allocation7 + $0x248] sm:$0xff]
        %v548 = vld [vmem:[#allocation7 + $0x250] sm:$0xff]
        %v549 = vld [vmem:[#allocation7 + $0x258] sm:$0xff]
        %v550 = vld [vmem:[#allocation7 + $0x260] sm:$0xff]
        %v551 = vld [vmem:[#allocation7 + $0x268] sm:$0xff]
        %v552 = vld [vmem:[#allocation7 + $0x270] sm:$0xff]
        %v553 = vld [vmem:[#allocation7 + $0x278] sm:$0xff]
        %v554 = vld [vmem:[#allocation7 + $0x280] sm:$0xff]
        %v555 = vld [vmem:[#allocation7 + $0x288] sm:$0xff]
        %v556 = vld [vmem:[#allocation7 + $0x290] sm:$0xff]
        %v557 = vld [vmem:[#allocation7 + $0x298] sm:$0xff]
        %v558 = vld [vmem:[#allocation7 + $0x2a0] sm:$0xff]
        %v559 = vld [vmem:[#allocation7 + $0x2a8] sm:$0xff]
        %v560 = vld [vmem:[#allocation7 + $0x2b0] sm:$0xff]
        %v561 = vld [vmem:[#allocation7 + $0x2b8] sm:$0xff]
        %v562 = vld [vmem:[#allocation7 + $0x2c0] sm:$0xff]
        %v563 = vld [vmem:[#allocation7 + $0x2c8] sm:$0xff]
        %v564 = vld [vmem:[#allocation7 + $0x2d0] sm:$0xff]
        %v565 = vld [vmem:[#allocation7 + $0x2d8] sm:$0xff]
        %v566 = vld [vmem:[#allocation7 + $0x2e0] sm:$0xff]
        %v567 = vld [vmem:[#allocation7 + $0x2e8] sm:$0xff]
        %v568 = vld [vmem:[#allocation7 + $0x2f0] sm:$0xff]
        %v569 = vld [vmem:[#allocation7 + $0x2f8] sm:$0xff]
        %v570 = vld [vmem:[#allocation7 + $0x300] sm:$0xff]
        %v571 = vld [vmem:[#allocation7 + $0x308] sm:$0xff]
        %v572 = vld [vmem:[#allocation7 + $0x310] sm:$0xff]
        %v573 = vld [vmem:[#allocation7 + $0x318] sm:$0xff]
        %v574 = vld [vmem:[#allocation7 + $0x320] sm:$0xff]
        %v575 = vld [vmem:[#allocation7 + $0x328] sm:$0xff]
        %v576 = vld [vmem:[#allocation7 + $0x330] sm:$0xff]
        %v577 = vld [vmem:[#allocation7 + $0x338] sm:$0xff]
        %v578 = vld [vmem:[#allocation7 + $0x340] sm:$0xff]
        %v579 = vld [vmem:[#allocation7 + $0x348] sm:$0xff]
        %v580 = vld [vmem:[#allocation7 + $0x350] sm:$0xff]
        %v581 = vld [vmem:[#allocation7 + $0x358] sm:$0xff]
        %v582 = vld [vmem:[#allocation7 + $0x360] sm:$0xff]
        %v583 = vld [vmem:[#allocation7 + $0x368] sm:$0xff]
        %v584 = vld [vmem:[#allocation7 + $0x370] sm:$0xff]
        %v585 = vld [vmem:[#allocation7 + $0x378] sm:$0xff]
        %v586 = vld [vmem:[#allocation7 + $0x380] sm:$0xff]
        %v587 = vld [vmem:[#allocation7 + $0x388] sm:$0xff]
        %v588 = vld [vmem:[#allocation7 + $0x390] sm:$0xff]
        %v589 = vld [vmem:[#allocation7 + $0x398] sm:$0xff]
        %v590 = vld [vmem:[#allocation7 + $0x3a0] sm:$0xff]
        %v591 = vld [vmem:[#allocation7 + $0x3a8] sm:$0xff]
        %v592 = vld [vmem:[#allocation7 + $0x3b0] sm:$0xff]
        %v593 = vld [vmem:[#allocation7 + $0x3b8] sm:$0xff]
        %v594 = vld [vmem:[#allocation7 + $0x3c0] sm:$0xff]
        %v595 = vld [vmem:[#allocation7 + $0x3c8] sm:$0xff]
        %v596 = vld [vmem:[#allocation7 + $0x3d0] sm:$0xff]
        %v597 = vld [vmem:[#allocation7 + $0x3d8] sm:$0xff]
        %v598 = vld [vmem:[#allocation7 + $0x3e0] sm:$0xff]
        %v599 = vld [vmem:[#allocation7 + $0x3e8] sm:$0xff]
        %v600 = vld [vmem:[#allocation7 + $0x3f0] sm:$0xff]
        %v601 = vld [vmem:[#allocation7 + $0x3f8] sm:$0xff]
        %v602 = vld [vmem:[%s2] sm:$0x3]
        %v604 = vlaneseq
        %v605 = vshrl.u32 %v604, 7
        %v606 = vsub.s32 0, %v605
        %v607 = vrot.slane %v602, %v606
        %v608 = vlaneseq
        %v609 = vshrl.u32 %v608, 7
        %v610 = vsub.s32 1, %v609
        %v611 = vrot.slane %v602, %v610
        %614 = vmatprep.subr.mxu0 %v347
        %615 = vmatpush1.msra.mxu0 %v346
        %616 = vmatprep.subr.mxu0 %v349
        %617 = vmatpush1.msra.mxu0 %v348
        %618 = vmatprep.subr.mxu0 %v351
        %619 = vmatpush1.msra.mxu0 %v350
        %620 = vmatprep.subr.mxu0 %v353
        %621 = vmatpush1.msra.mxu0 %v352
        %622 = vmatprep.subr.mxu0 %v355
        %623 = vmatpush1.msra.mxu0 %v354
        %624 = vmatprep.subr.mxu0 %v357
        %625 = vmatpush1.msra.mxu0 %v356
        %626 = vmatprep.subr.mxu0 %v359
        %627 = vmatpush1.msra.mxu0 %v358
        %628 = vmatprep.subr.mxu0 %v361
        %629 = vmatpush1.msra.mxu0 %v360
        %630 = vmatprep.subr.mxu0 %v363
        %631 = vmatpush1.msra.mxu0 %v362
        %632 = vmatprep.subr.mxu0 %v365
        %633 = vmatpush1.msra.mxu0 %v364
        %634 = vmatprep.subr.mxu0 %v367
        %635 = vmatpush1.msra.mxu0 %v366
        %636 = vmatprep.subr.mxu0 %v369
        %637 = vmatpush1.msra.mxu0 %v368
        %638 = vmatprep.subr.mxu0 %v371
        %639 = vmatpush1.msra.mxu0 %v370
        %640 = vmatprep.subr.mxu0 %v373
        %641 = vmatpush1.msra.mxu0 %v372
        %642 = vmatprep.subr.mxu0 %v375
        %643 = vmatpush1.msra.mxu0 %v374
        %644 = vmatprep.subr.mxu0 %v377
        %645 = vmatpush1.msra.mxu0 %v376
        %646 = vmatprep.subr.mxu0 %v379
        %647 = vmatpush1.msra.mxu0 %v378
        %648 = vmatprep.subr.mxu0 %v381
        %649 = vmatpush1.msra.mxu0 %v380
        %650 = vmatprep.subr.mxu0 %v383
        %651 = vmatpush1.msra.mxu0 %v382
        %652 = vmatprep.subr.mxu0 %v385
        %653 = vmatpush1.msra.mxu0 %v384
        %654 = vmatprep.subr.mxu0 %v387
        %655 = vmatpush1.msra.mxu0 %v386
        %656 = vmatprep.subr.mxu0 %v389
        %657 = vmatpush1.msra.mxu0 %v388
        %658 = vmatprep.subr.mxu0 %v391
        %659 = vmatpush1.msra.mxu0 %v390
        %660 = vmatprep.subr.mxu0 %v393
        %661 = vmatpush1.msra.mxu0 %v392
        %662 = vmatprep.subr.mxu0 %v395
        %663 = vmatpush1.msra.mxu0 %v394
        %664 = vmatprep.subr.mxu0 %v397
        %665 = vmatpush1.msra.mxu0 %v396
        %666 = vmatprep.subr.mxu0 %v399
        %667 = vmatpush1.msra.mxu0 %v398
        %668 = vmatprep.subr.mxu0 %v401
        %669 = vmatpush1.msra.mxu0 %v400
        %670 = vmatprep.subr.mxu0 %v403
        %671 = vmatpush1.msra.mxu0 %v402
        %672 = vmatprep.subr.mxu0 %v405
        %673 = vmatpush1.msra.mxu0 %v404
        %674 = vmatprep.subr.mxu0 %v407
        %675 = vmatpush1.msra.mxu0 %v406
        %676 = vmatprep.subr.mxu0 %v409
        %677 = vmatpush1.msra.mxu0 %v408
        %678 = vmatprep.mubr.f32.mxu0 %v315
        %679 = vmatmul.mubr.f32.gmra.mrb[0].mxu0 %v314
        %v680 = vpop.f32.mrb[0].mxu0
        %v681 = vadd.f32 %v607, %v680
        %v682 = vpop.f32.mrb[0].mxu0
        %v683 = vadd.f32 %v611, %v682
        %684 = vmatprep.mubr.f32.mxu0 %v319
        %685 = vmatmul.mubr.f32.gmra.mrb[0].mxu0 %v318
        %v686 = vpop.f32.mrb[0].mxu0
        %v687 = vadd.f32 %v607, %v686
        %v688 = vpop.f32.mrb[0].mxu0
        %v689 = vadd.f32 %v611, %v688
        %690 = vmatprep.mubr.f32.mxu0 %v323
        %691 = vmatmul.mubr.f32.gmra.mrb[0].mxu0 %v322
        %v692 = vpop.f32.mrb[0].mxu0
        %v693 = vadd.f32 %v607, %v692
        %v694 = vpop.f32.mrb[0].mxu0
        %v695 = vadd.f32 %v611, %v694
        %696 = vmatprep.mubr.f32.mxu0 %v327
        %697 = vmatmul.mubr.f32.gmra.mrb[0].mxu0 %v326
        %v698 = vpop.f32.mrb[0].mxu0
        %v699 = vadd.f32 %v607, %v698
        %v700 = vpop.f32.mrb[0].mxu0
        %v701 = vadd.f32 %v611, %v700
        %702 = vmatprep.mubr.f32.mxu0 %v331
        %703 = vmatmul.mubr.f32.gmra.mrb[0].mxu0 %v330
        %v704 = vpop.f32.mrb[0].mxu0
        %v705 = vadd.f32 %v607, %v704
        %v706 = vpop.f32.mrb[0].mxu0
        %v707 = vadd.f32 %v611, %v706
        %708 = vmatprep.mubr.f32.mxu0 %v335
        %709 = vmatmul.mubr.f32.gmra.mrb[0].mxu0 %v334
        %v710 = vpop.f32.mrb[0].mxu0
        %v711 = vadd.f32 %v607, %v710
        %v712 = vpop.f32.mrb[0].mxu0
        %v713 = vadd.f32 %v611, %v712
        %714 = vmatprep.mubr.f32.mxu0 %v339
        %715 = vmatmul.mubr.f32.gmra.mrb[0].mxu0 %v338
        %v716 = vpop.f32.mrb[0].mxu0
        %v717 = vadd.f32 %v607, %v716
        %v718 = vpop.f32.mrb[0].mxu0
        %v719 = vadd.f32 %v611, %v718
        %720 = vmatprep.mubr.f32.mxu0 %v343
        %721 = vmatmul.mubr.f32.gmra.mrb[0].mxu0 %v342
        %v722 = vpop.f32.mrb[0].mxu0
        %v723 = vadd.f32 %v607, %v722
        %v724 = vpop.f32.mrb[0].mxu0
        %v725 = vadd.f32 %v611, %v724
        %726 = vdwg.mxu0
        %727 = vmatprep.subr.mxu0 %v411
        %728 = vmatpush1.msra.mxu0 %v410
        %729 = vmatprep.subr.mxu0 %v413
        %730 = vmatpush1.msra.mxu0 %v412
        %731 = vmatprep.subr.mxu0 %v415
        %732 = vmatpush1.msra.mxu0 %v414
        %733 = vmatprep.subr.mxu0 %v417
        %734 = vmatpush1.msra.mxu0 %v416
        %735 = vmatprep.subr.mxu0 %v419
        %736 = vmatpush1.msra.mxu0 %v418
        %737 = vmatprep.subr.mxu0 %v421
        %738 = vmatpush1.msra.mxu0 %v420
        %739 = vmatprep.subr.mxu0 %v423
        %740 = vmatpush1.msra.mxu0 %v422
        %741 = vmatprep.subr.mxu0 %v425
        %742 = vmatpush1.msra.mxu0 %v424
        %743 = vmatprep.subr.mxu0 %v427
        %744 = vmatpush1.msra.mxu0 %v426
        %745 = vmatprep.subr.mxu0 %v429
        %746 = vmatpush1.msra.mxu0 %v428
        %747 = vmatprep.subr.mxu0 %v431
        %748 = vmatpush1.msra.mxu0 %v430
        %749 = vmatprep.subr.mxu0 %v433
        %750 = vmatpush1.msra.mxu0 %v432
        %751 = vmatprep.subr.mxu0 %v435
        %752 = vmatpush1.msra.mxu0 %v434
        %753 = vmatprep.subr.mxu0 %v437
        %754 = vmatpush1.msra.mxu0 %v436
        %755 = vmatprep.subr.mxu0 %v439
        %756 = vmatpush1.msra.mxu0 %v438
        %757 = vmatprep.subr.mxu0 %v441
        %758 = vmatpush1.msra.mxu0 %v440
        %759 = vmatprep.subr.mxu0 %v443
        %760 = vmatpush1.msra.mxu0 %v442
        %761 = vmatprep.subr.mxu0 %v445
        %762 = vmatpush1.msra.mxu0 %v444
        %763 = vmatprep.subr.mxu0 %v447
        %764 = vmatpush1.msra.mxu0 %v446
        %765 = vmatprep.subr.mxu0 %v449
        %766 = vmatpush1.msra.mxu0 %v448
        %767 = vmatprep.subr.mxu0 %v451
        %768 = vmatpush1.msra.mxu0 %v450
        %769 = vmatprep.subr.mxu0 %v453
        %770 = vmatpush1.msra.mxu0 %v452
        %771 = vmatprep.subr.mxu0 %v455
        %772 = vmatpush1.msra.mxu0 %v454
        %773 = vmatprep.subr.mxu0 %v457
        %774 = vmatpush1.msra.mxu0 %v456
        %775 = vmatprep.subr.mxu0 %v459
        %776 = vmatpush1.msra.mxu0 %v458
        %777 = vmatprep.subr.mxu0 %v461
        %778 = vmatpush1.msra.mxu0 %v460
        %779 = vmatprep.subr.mxu0 %v463
        %780 = vmatpush1.msra.mxu0 %v462
        %781 = vmatprep.subr.mxu0 %v465
        %782 = vmatpush1.msra.mxu0 %v464
        %783 = vmatprep.subr.mxu0 %v467
        %784 = vmatpush1.msra.mxu0 %v466
        %785 = vmatprep.subr.mxu0 %v469
        %786 = vmatpush1.msra.mxu0 %v468
        %787 = vmatprep.subr.mxu0 %v471
        %788 = vmatpush1.msra.mxu0 %v470
        %789 = vmatprep.subr.mxu0 %v473
        %790 = vmatpush1.msra.mxu0 %v472
        %791 = vmatprep.mubr.f32.mxu0 %v317
        %792 = vmatmul.mubr.f32.gmra.mrb[0].mxu0 %v316
        %v793 = vpop.f32.mrb[0].mxu0
        %v794 = vadd.f32 %v681, %v793
        %v795 = vpop.f32.mrb[0].mxu0
        %v796 = vadd.f32 %v683, %v795
        %797 = vmatprep.mubr.f32.mxu0 %v321
        %798 = vmatmul.mubr.f32.gmra.mrb[0].mxu0 %v320
        %v799 = vpop.f32.mrb[0].mxu0
        %v800 = vadd.f32 %v687, %v799
        %v801 = vpop.f32.mrb[0].mxu0
        %v802 = vadd.f32 %v689, %v801
        %803 = vmatprep.mubr.f32.mxu0 %v325
        %804 = vmatmul.mubr.f32.gmra.mrb[0].mxu0 %v324
        %v805 = vpop.f32.mrb[0].mxu0
        %v806 = vadd.f32 %v693, %v805
        %v807 = vpop.f32.mrb[0].mxu0
        %v808 = vadd.f32 %v695, %v807
        %809 = vmatprep.mubr.f32.mxu0 %v329
        %810 = vmatmul.mubr.f32.gmra.mrb[0].mxu0 %v328
        %v811 = vpop.f32.mrb[0].mxu0
        %v812 = vadd.f32 %v699, %v811
        %v813 = vpop.f32.mrb[0].mxu0
        %v814 = vadd.f32 %v701, %v813
        %815 = vmatprep.mubr.f32.mxu0 %v333
        %816 = vmatmul.mubr.f32.gmra.mrb[0].mxu0 %v332
        %v817 = vpop.f32.mrb[0].mxu0
        %v818 = vadd.f32 %v705, %v817
        %v819 = vpop.f32.mrb[0].mxu0
        %v820 = vadd.f32 %v707, %v819
        %821 = vmatprep.mubr.f32.mxu0 %v337
        %822 = vmatmul.mubr.f32.gmra.mrb[0].mxu0 %v336
        %v823 = vpop.f32.mrb[0].mxu0
        %v824 = vadd.f32 %v711, %v823
        %v825 = vpop.f32.mrb[0].mxu0
        %v826 = vadd.f32 %v713, %v825
        %827 = vmatprep.mubr.f32.mxu0 %v341
        %828 = vmatmul.mubr.f32.gmra.mrb[0].mxu0 %v340
        %v829 = vpop.f32.mrb[0].mxu0
        %v830 = vadd.f32 %v717, %v829
        %v831 = vpop.f32.mrb[0].mxu0
        %v832 = vadd.f32 %v719, %v831
        %833 = vmatprep.mubr.f32.mxu0 %v345
        %834 = vmatmul.mubr.f32.gmra.mrb[0].mxu0 %v344
        %v835 = vpop.f32.mrb[0].mxu0
        %v836 = vadd.f32 %v723, %v835
        %v837 = vpop.f32.mrb[0].mxu0
        %v838 = vadd.f32 %v725, %v837
        %839 = vdwg.mxu0
        %840 = vst [vmem:[%s303] sm:$0xff] %v794
        %841 = vst [vmem:[%s303 + $0x8] sm:$0xff] %v796
        %842 = vst [vmem:[%s303 + $0x10] sm:$0xff] %v800
        %843 = vst [vmem:[%s303 + $0x18] sm:$0xff] %v802
        %844 = vst [vmem:[%s303 + $0x20] sm:$0xff] %v806
        %845 = vst [vmem:[%s303 + $0x28] sm:$0xff] %v808
        %846 = vst [vmem:[%s303 + $0x30] sm:$0xff] %v812
        %847 = vst [vmem:[%s303 + $0x38] sm:$0xff] %v814
        %848 = vst [vmem:[%s303 + $0x40] sm:$0xff] %v818
        %849 = vst [vmem:[%s303 + $0x48] sm:$0xff] %v820
        %850 = vst [vmem:[%s303 + $0x50] sm:$0xff] %v824
        %851 = vst [vmem:[%s303 + $0x58] sm:$0xff] %v826
        %852 = vst [vmem:[%s303 + $0x60] sm:$0xff] %v830
        %853 = vst [vmem:[%s303 + $0x68] sm:$0xff] %v832
        %854 = vst [vmem:[%s303 + $0x70] sm:$0xff] %v836
        %855 = vst [vmem:[%s303 + $0x78] sm:$0xff] %v838
        %v856 = vld [vmem:[%s4] sm:$0xf]
        %v858 = vlaneseq
        %v859 = vshrl.u32 %v858, 7
        %v860 = vsub.s32 0, %v859
        %v861 = vrot.slane %v856, %v860
        %v862 = vlaneseq
        %v863 = vshrl.u32 %v862, 7
        %v864 = vsub.s32 1, %v863
        %v865 = vrot.slane %v856, %v864
        %v866 = vlaneseq
        %v867 = vshrl.u32 %v866, 7
        %v868 = vsub.s32 2, %v867
        %v869 = vrot.slane %v856, %v868
        %v870 = vlaneseq
        %v871 = vshrl.u32 %v870, 7
        %v872 = vsub.s32 3, %v871
        %v873 = vrot.slane %v856, %v872
        %878 = vmatprep.subr.mxu0 %v475
        %879 = vmatpush1.msra.mxu0 %v474
        %880 = vmatprep.subr.mxu0 %v479
        %881 = vmatpush1.msra.mxu0 %v478
        %882 = vmatprep.subr.mxu0 %v483
        %883 = vmatpush1.msra.mxu0 %v482
        %884 = vmatprep.subr.mxu0 %v487
        %885 = vmatpush1.msra.mxu0 %v486
        %886 = vmatprep.subr.mxu0 %v491
        %887 = vmatpush1.msra.mxu0 %v490
        %888 = vmatprep.subr.mxu0 %v495
        %889 = vmatpush1.msra.mxu0 %v494
        %890 = vmatprep.subr.mxu0 %v499
        %891 = vmatpush1.msra.mxu0 %v498
        %892 = vmatprep.subr.mxu0 %v503
        %893 = vmatpush1.msra.mxu0 %v502
        %894 = vmatprep.subr.mxu0 %v507
        %895 = vmatpush1.msra.mxu0 %v506
        %896 = vmatprep.subr.mxu0 %v511
        %897 = vmatpush1.msra.mxu0 %v510
        %898 = vmatprep.subr.mxu0 %v515
        %899 = vmatpush1.msra.mxu0 %v514
        %900 = vmatprep.subr.mxu0 %v519
        %901 = vmatpush1.msra.mxu0 %v518
        %902 = vmatprep.subr.mxu0 %v523
        %903 = vmatpush1.msra.mxu0 %v522
        %904 = vmatprep.subr.mxu0 %v527
        %905 = vmatpush1.msra.mxu0 %v526
        %906 = vmatprep.subr.mxu0 %v531
        %907 = vmatpush1.msra.mxu0 %v530
        %908 = vmatprep.subr.mxu0 %v535
        %909 = vmatpush1.msra.mxu0 %v534
        %910 = vmatprep.subr.mxu0 %v539
        %911 = vmatpush1.msra.mxu0 %v538
        %912 = vmatprep.subr.mxu0 %v543
        %913 = vmatpush1.msra.mxu0 %v542
        %914 = vmatprep.subr.mxu0 %v547
        %915 = vmatpush1.msra.mxu0 %v546
        %916 = vmatprep.subr.mxu0 %v551
        %917 = vmatpush1.msra.mxu0 %v550
        %918 = vmatprep.subr.mxu0 %v555
        %919 = vmatpush1.msra.mxu0 %v554
        %920 = vmatprep.subr.mxu0 %v559
        %921 = vmatpush1.msra.mxu0 %v558
        %922 = vmatprep.subr.mxu0 %v563
        %923 = vmatpush1.msra.mxu0 %v562
        %924 = vmatprep.subr.mxu0 %v567
        %925 = vmatpush1.msra.mxu0 %v566
        %926 = vmatprep.subr.mxu0 %v571
        %927 = vmatpush1.msra.mxu0 %v570
        %928 = vmatprep.subr.mxu0 %v575
        %929 = vmatpush1.msra.mxu0 %v574
        %930 = vmatprep.subr.mxu0 %v579
        %931 = vmatpush1.msra.mxu0 %v578
        %932 = vmatprep.subr.mxu0 %v583
        %933 = vmatpush1.msra.mxu0 %v582
        %934 = vmatprep.subr.mxu0 %v587
        %935 = vmatpush1.msra.mxu0 %v586
        %936 = vmatprep.subr.mxu0 %v591
        %937 = vmatpush1.msra.mxu0 %v590
        %938 = vmatprep.subr.mxu0 %v595
        %939 = vmatpush1.msra.mxu0 %v594
        %940 = vmatprep.subr.mxu0 %v599
        %941 = vmatpush1.msra.mxu0 %v598
        %942 = vmatprep.mubr.f32.mxu0 %v796
        %943 = vmatmul.mubr.f32.gmra.mrb[0].mxu0 %v794
        %v944 = vpop.f32.mrb[0].mxu0
        %v945 = vadd.f32 %v861, %v944
        %v946 = vpop.f32.mrb[0].mxu0
        %v947 = vadd.f32 %v865, %v946
        %948 = vmatprep.mubr.f32.mxu0 %v802
        %949 = vmatmul.mubr.f32.gmra.mrb[0].mxu0 %v800
        %v950 = vpop.f32.mrb[0].mxu0
        %v951 = vadd.f32 %v861, %v950
        %v952 = vpop.f32.mrb[0].mxu0
        %v953 = vadd.f32 %v865, %v952
        %954 = vmatprep.mubr.f32.mxu0 %v808
        %955 = vmatmul.mubr.f32.gmra.mrb[0].mxu0 %v806
        %v956 = vpop.f32.mrb[0].mxu0
        %v957 = vadd.f32 %v861, %v956
        %v958 = vpop.f32.mrb[0].mxu0
        %v959 = vadd.f32 %v865, %v958
        %960 = vmatprep.mubr.f32.mxu0 %v814
        %961 = vmatmul.mubr.f32.gmra.mrb[0].mxu0 %v812
        %v962 = vpop.f32.mrb[0].mxu0
        %v963 = vadd.f32 %v861, %v962
        %v964 = vpop.f32.mrb[0].mxu0
        %v965 = vadd.f32 %v865, %v964
        %966 = vmatprep.mubr.f32.mxu0 %v820
        %967 = vmatmul.mubr.f32.gmra.mrb[0].mxu0 %v818
        %v968 = vpop.f32.mrb[0].mxu0
        %v969 = vadd.f32 %v861, %v968
        %v970 = vpop.f32.mrb[0].mxu0
        %v971 = vadd.f32 %v865, %v970
        %972 = vmatprep.mubr.f32.mxu0 %v826
        %973 = vmatmul.mubr.f32.gmra.mrb[0].mxu0 %v824
        %v974 = vpop.f32.mrb[0].mxu0
        %v975 = vadd.f32 %v861, %v974
        %v976 = vpop.f32.mrb[0].mxu0
        %v977 = vadd.f32 %v865, %v976
        %978 = vmatprep.mubr.f32.mxu0 %v832
        %979 = vmatmul.mubr.f32.gmra.mrb[0].mxu0 %v830
        %v980 = vpop.f32.mrb[0].mxu0
        %v981 = vadd.f32 %v861, %v980
        %v982 = vpop.f32.mrb[0].mxu0
        %v983 = vadd.f32 %v865, %v982
        %984 = vmatprep.mubr.f32.mxu0 %v838
        %985 = vmatmul.mubr.f32.gmra.mrb[0].mxu0 %v836
        %v986 = vpop.f32.mrb[0].mxu0
        %v987 = vadd.f32 %v861, %v986
        %v988 = vpop.f32.mrb[0].mxu0
        %v989 = vadd.f32 %v865, %v988
        %990 = vdwg.mxu0
        %991 = vmatprep.subr.mxu0 %v477
        %992 = vmatpush1.msra.mxu0 %v476
        %993 = vmatprep.subr.mxu0 %v481
        %994 = vmatpush1.msra.mxu0 %v480
        %995 = vmatprep.subr.mxu0 %v485
        %996 = vmatpush1.msra.mxu0 %v484
        %997 = vmatprep.subr.mxu0 %v489
        %998 = vmatpush1.msra.mxu0 %v488
        %999 = vmatprep.subr.mxu0 %v493
        %1000 = vmatpush1.msra.mxu0 %v492
        %1001 = vmatprep.subr.mxu0 %v497
        %1002 = vmatpush1.msra.mxu0 %v496
        %1003 = vmatprep.subr.mxu0 %v501
        %1004 = vmatpush1.msra.mxu0 %v500
        %1005 = vmatprep.subr.mxu0 %v505
        %1006 = vmatpush1.msra.mxu0 %v504
        %1007 = vmatprep.subr.mxu0 %v509
        %1008 = vmatpush1.msra.mxu0 %v508
        %1009 = vmatprep.subr.mxu0 %v513
        %1010 = vmatpush1.msra.mxu0 %v512
        %1011 = vmatprep.subr.mxu0 %v517
        %1012 = vmatpush1.msra.mxu0 %v516
        %1013 = vmatprep.subr.mxu0 %v521
        %1014 = vmatpush1.msra.mxu0 %v520
        %1015 = vmatprep.subr.mxu0 %v525
        %1016 = vmatpush1.msra.mxu0 %v524
        %1017 = vmatprep.subr.mxu0 %v529
        %1018 = vmatpush1.msra.mxu0 %v528
        %1019 = vmatprep.subr.mxu0 %v533
        %1020 = vmatpush1.msra.mxu0 %v532
        %1021 = vmatprep.subr.mxu0 %v537
        %1022 = vmatpush1.msra.mxu0 %v536
        %1023 = vmatprep.subr.mxu0 %v541
        %1024 = vmatpush1.msra.mxu0 %v540
        %1025 = vmatprep.subr.mxu0 %v545
        %1026 = vmatpush1.msra.mxu0 %v544
        %1027 = vmatprep.subr.mxu0 %v549
        %1028 = vmatpush1.msra.mxu0 %v548
        %1029 = vmatprep.subr.mxu0 %v553
        %1030 = vmatpush1.msra.mxu0 %v552
        %1031 = vmatprep.subr.mxu0 %v557
        %1032 = vmatpush1.msra.mxu0 %v556
        %1033 = vmatprep.subr.mxu0 %v561
        %1034 = vmatpush1.msra.mxu0 %v560
        %1035 = vmatprep.subr.mxu0 %v565
        %1036 = vmatpush1.msra.mxu0 %v564
        %1037 = vmatprep.subr.mxu0 %v569
        %1038 = vmatpush1.msra.mxu0 %v568
        %1039 = vmatprep.subr.mxu0 %v573
        %1040 = vmatpush1.msra.mxu0 %v572
        %1041 = vmatprep.subr.mxu0 %v577
        %1042 = vmatpush1.msra.mxu0 %v576
        %1043 = vmatprep.subr.mxu0 %v581
        %1044 = vmatpush1.msra.mxu0 %v580
        %1045 = vmatprep.subr.mxu0 %v585
        %1046 = vmatpush1.msra.mxu0 %v584
        %1047 = vmatprep.subr.mxu0 %v589
        %1048 = vmatpush1.msra.mxu0 %v588
        %1049 = vmatprep.subr.mxu0 %v593
        %1050 = vmatpush1.msra.mxu0 %v592
        %1051 = vmatprep.subr.mxu0 %v597
        %1052 = vmatpush1.msra.mxu0 %v596
        %1053 = vmatprep.subr.mxu0 %v601
        %1054 = vmatpush1.msra.mxu0 %v600
        %1055 = vmatprep.mubr.f32.mxu0 %v796
        %1056 = vmatmul.mubr.f32.gmra.mrb[0].mxu0 %v794
        %v1057 = vpop.f32.mrb[0].mxu0
        %v1058 = vadd.f32 %v869, %v1057
        %v1059 = vpop.f32.mrb[0].mxu0
        %v1060 = vadd.f32 %v873, %v1059
        %1061 = vmatprep.mubr.f32.mxu0 %v802
        %1062 = vmatmul.mubr.f32.gmra.mrb[0].mxu0 %v800
        %v1063 = vpop.f32.mrb[0].mxu0
        %v1064 = vadd.f32 %v869, %v1063
        %v1065 = vpop.f32.mrb[0].mxu0
        %v1066 = vadd.f32 %v873, %v1065
        %1067 = vmatprep.mubr.f32.mxu0 %v808
        %1068 = vmatmul.mubr.f32.gmra.mrb[0].mxu0 %v806
        %v1069 = vpop.f32.mrb[0].mxu0
        %v1070 = vadd.f32 %v869, %v1069
        %v1071 = vpop.f32.mrb[0].mxu0
        %v1072 = vadd.f32 %v873, %v1071
        %1073 = vmatprep.mubr.f32.mxu0 %v814
        %1074 = vmatmul.mubr.f32.gmra.mrb[0].mxu0 %v812
        %v1075 = vpop.f32.mrb[0].mxu0
        %v1076 = vadd.f32 %v869, %v1075
        %v1077 = vpop.f32.mrb[0].mxu0
        %v1078 = vadd.f32 %v873, %v1077
        %1079 = vmatprep.mubr.f32.mxu0 %v820
        %1080 = vmatmul.mubr.f32.gmra.mrb[0].mxu0 %v818
        %v1081 = vpop.f32.mrb[0].mxu0
        %v1082 = vadd.f32 %v869, %v1081
        %v1083 = vpop.f32.mrb[0].mxu0
        %v1084 = vadd.f32 %v873, %v1083
        %1085 = vmatprep.mubr.f32.mxu0 %v826
        %1086 = vmatmul.mubr.f32.gmra.mrb[0].mxu0 %v824
        %v1087 = vpop.f32.mrb[0].mxu0
        %v1088 = vadd.f32 %v869, %v1087
        %v1089 = vpop.f32.mrb[0].mxu0
        %v1090 = vadd.f32 %v873, %v1089
        %1091 = vmatprep.mubr.f32.mxu0 %v832
        %1092 = vmatmul.mubr.f32.gmra.mrb[0].mxu0 %v830
        %v1093 = vpop.f32.mrb[0].mxu0
        %v1094 = vadd.f32 %v869, %v1093
        %v1095 = vpop.f32.mrb[0].mxu0
        %v1096 = vadd.f32 %v873, %v1095
        %1097 = vmatprep.mubr.f32.mxu0 %v838
        %1098 = vmatmul.mubr.f32.gmra.mrb[0].mxu0 %v836
        %v1099 = vpop.f32.mrb[0].mxu0
        %v1100 = vadd.f32 %v869, %v1099
        %v1101 = vpop.f32.mrb[0].mxu0
        %v1102 = vadd.f32 %v873, %v1101
        %1103 = vdwg.mxu0
        %1104 = vst [vmem:[%s310] sm:$0xff] %v945
        %1105 = vst [vmem:[%s310 + $0x8] sm:$0xff] %v947
        %1106 = vst [vmem:[%s310 + $0x10] sm:$0xff] %v1058
        %1107 = vst [vmem:[%s310 + $0x18] sm:$0xff] %v1060
        %1108 = vst [vmem:[%s310 + $0x20] sm:$0xff] %v951
        %1109 = vst [vmem:[%s310 + $0x28] sm:$0xff] %v953
        %1110 = vst [vmem:[%s310 + $0x30] sm:$0xff] %v1064
        %1111 = vst [vmem:[%s310 + $0x38] sm:$0xff] %v1066
        %1112 = vst [vmem:[%s310 + $0x40] sm:$0xff] %v957
        %1113 = vst [vmem:[%s310 + $0x48] sm:$0xff] %v959
        %1114 = vst [vmem:[%s310 + $0x50] sm:$0xff] %v1070
        %1115 = vst [vmem:[%s310 + $0x58] sm:$0xff] %v1072
        %1116 = vst [vmem:[%s310 + $0x60] sm:$0xff] %v963
        %1117 = vst [vmem:[%s310 + $0x68] sm:$0xff] %v965
        %1118 = vst [vmem:[%s310 + $0x70] sm:$0xff] %v1076
        %1119 = vst [vmem:[%s310 + $0x78] sm:$0xff] %v1078
        %1120 = vst [vmem:[%s310 + $0x80] sm:$0xff] %v969
        %1121 = vst [vmem:[%s310 + $0x88] sm:$0xff] %v971
        %1122 = vst [vmem:[%s310 + $0x90] sm:$0xff] %v1082
        %1123 = vst [vmem:[%s310 + $0x98] sm:$0xff] %v1084
        %1124 = vst [vmem:[%s310 + $0xa0] sm:$0xff] %v975
        %1125 = vst [vmem:[%s310 + $0xa8] sm:$0xff] %v977
        %1126 = vst [vmem:[%s310 + $0xb0] sm:$0xff] %v1088
        %1127 = vst [vmem:[%s310 + $0xb8] sm:$0xff] %v1090
        %1128 = vst [vmem:[%s310 + $0xc0] sm:$0xff] %v981
        %1129 = vst [vmem:[%s310 + $0xc8] sm:$0xff] %v983
        %1130 = vst [vmem:[%s310 + $0xd0] sm:$0xff] %v1094
        %1131 = vst [vmem:[%s310 + $0xd8] sm:$0xff] %v1096
        %1132 = vst [vmem:[%s310 + $0xe0] sm:$0xff] %v987
        %1133 = vst [vmem:[%s310 + $0xe8] sm:$0xff] %v989
        %1134 = vst [vmem:[%s310 + $0xf0] sm:$0xff] %v1100
        %1135 = vst [vmem:[%s310 + $0xf8] sm:$0xff] %v1102
        %s1136 = sand.u32 %s146, 1
        %s1137 = scalar_lea.sflag [#allocation4], %s1136
        %s1138 = sand.u32 %s146, 1
        %s1139 = smul.addr %s1138, 128
        %s1140 = scalar_lea.vmem [#allocation8], %s1139
        %s1141 = sand.u32 %s172, 1
        %s1142 = scalar_lea.sflag [#allocation10], %s1141
        %s1143 = sand.u32 %s172, 1
        %s1144 = smul.addr %s1143, 256
        %s1145 = scalar_lea.vmem [#allocation9], %s1144
        // Predicated region
        $region53: #{tpu_custom_call.1} parent=39 // pred_check
          %p1146 = pneg %p156
        $region54: #{tpu_custom_call.1} parent=39 // pred_check_branch
          %1148 = sbr.rel (%p1146) target = $region56
        $region55: #{tpu_custom_call.1} parent=39 // pred_region
          %s1149 = smul.u32 8, %s28
          %s1151 = ssub.s32 2048, 2048
          %1152 = vsyncadd %s1137, %s1151
          %s1153 = smul.addr %s1149, 2
          %s1154 = smul.addr %s1153, 128
          %s1155 = scalar_lea.hbm %s5, %s1154
          %s1156 = sshll.u32 %s1140, 4
          %s1157 = int_to_ptr.vmem [resolvable:$true] %s1156
          %1162 = dma.vmem_to_hbm [thread:$0]  %s1157, 2048, %s1155, %s1137, 256, 256, 16
        $region56: #{tpu_custom_call.1} parent=39 // pred_fallthru
          _
        // Predicated region
        $region57: #{tpu_custom_call.1} parent=39 // pred_check
          %p1163 = pneg %p182
        $region58: #{tpu_custom_call.1} parent=39 // pred_check_branch
          %1165 = sbr.rel (%p1163) target = $region60
        $region59: #{tpu_custom_call.1} parent=39 // pred_region
          %s1166 = smul.u32 8, %s28
          %s1168 = ssub.s32 4096, 4096
          %1169 = vsyncadd %s1142, %s1168
          %s1170 = smul.addr %s1166, 4
          %s1171 = smul.addr %s1170, 128
          %s1172 = scalar_lea.hbm %s6, %s1171
          %s1173 = sshll.u32 %s1145, 4
          %s1174 = int_to_ptr.vmem [resolvable:$true] %s1173
          %1179 = dma.vmem_to_hbm [thread:$0]  %s1174, 4096, %s1172, %s1142, 512, 512, 32
        $region60: #{tpu_custom_call.1} parent=39 // pred_fallthru
          _
      $region40: #{tpu_custom_call.1} parent=5 // pred_fallthru
        _
      %p1180 = scmp.le.s32.totalorder 2, %s23
      // Predicated region
      $region61: #{tpu_custom_call.1} parent=5 // pred_check
        %p1181 = pneg %p1180
      $region62: #{tpu_custom_call.1} parent=5 // pred_check_branch
        %1183 = sbr.rel (%p1181) target = $region64
      $region63: #{tpu_custom_call.1} parent=5 // pred_region
        %s1184 = ssub.s32 %s23, 2
        // Predicated region
        $region65: #{tpu_custom_call.1} parent=63 // pred_check
          %p1185 = pneg %p162
        $region66: #{tpu_custom_call.1} parent=63 // pred_check_branch
          %1187 = sbr.rel (%p1185) target = $region68
        $region67: #{tpu_custom_call.1} parent=63 // pred_region
          %s1188 = sand.u32 %s147, 1
          %s1189 = scalar_lea.sflag [#allocation4], %s1188
          %s1190 = sand.u32 %s147, 1
          %s1191 = smul.addr %s1190, 128
          %s1192 = scalar_lea.vmem [#allocation8], %s1191
          %1193 = dma.done %s1189, 2048
        $region68: #{tpu_custom_call.1} parent=63 // pred_fallthru
          _
        // Predicated region
        $region69: #{tpu_custom_call.1} parent=63 // pred_check
          %p1194 = pneg %p188
        $region70: #{tpu_custom_call.1} parent=63 // pred_check_branch
          %1196 = sbr.rel (%p1194) target = $region72
        $region71: #{tpu_custom_call.1} parent=63 // pred_region
          %s1197 = sand.u32 %s173, 1
          %s1198 = scalar_lea.sflag [#allocation10], %s1197
          %s1199 = sand.u32 %s173, 1
          %s1200 = smul.addr %s1199, 256
          %s1201 = scalar_lea.vmem [#allocation9], %s1200
          %1202 = dma.done %s1198, 4096
        $region72: #{tpu_custom_call.1} parent=63 // pred_fallthru
          _
      $region64: #{tpu_custom_call.1} parent=5 // pred_fallthru
        _
    $region6: #{tpu_custom_call.1} parent=1 // loop_footer
      %s27 = sadd.s32 1, %s23
    $region7: #{tpu_custom_call.1} parent=1 // loop_footer_branch
      %22 = sbr.rel target = $region3
    $region8: #{tpu_custom_call.1} parent=1 // loop_exit
      _
    %1203 = vsyncpa [#allocation3], 1
    %s1204 = scalar_lea.sflag [#allocation3], 1
    %1205 = vsyncpa %s1204, 1
    %1206 = vsyncpa [#allocation6], 1
    %1207 = vsyncpa [#allocation4], 1
    %s1208 = scalar_lea.sflag [#allocation4], 1
    %1209 = vsyncpa %s1208, 1
    %1210 = vsyncpa [#allocation10], 1
    %s1211 = scalar_lea.sflag [#allocation10], 1
    %1212 = vsyncpa %s1211, 1

</llo_original>
